<compile_context>
chip_gen: v6e
topology: v6e:2x2x1
jax: 0.10.0
libtpu: 0.0.40
codegen_flags: <defaults>
</compile_context>

<pallas_src>
import jax
import jax.numpy as jnp
from jax.experimental import pallas as pl
from jax.experimental.pallas import tpu as pltpu


def fused_kernel(x_ref, wl_ref, bl_ref, wc_ref, bc_ref, o_ref):
    """Fused linear(3->3) -> 4x4 maxpool -> conv2d(3->3, (1,3)) -> relu.

    x_ref : VMEM (3, 16*Wp, TN) bf16    rows ordered wp*16 + (ph*4 + pw), lanes = B*Hp tile
    wl_ref: VMEM (3, 3) bf16|f32        linear weight (out, in), in the compute dtype
    bl_ref: SMEM (3,)   f32             linear bias
    wc_ref: SMEM (27,)  f32             conv weight, (out, in, kw) row-major
    bc_ref: SMEM (3,)   f32             conv bias
    o_ref : VMEM (3, Wout, TN) bf16     (Cout, out W, lane tile of B*Hp)
    """
    n_pool = 16
    wp = x_ref.shape[1] // n_pool
    wout = o_ref.shape[1]
    cdt = wl_ref.dtype                      # bf16 on v6e/v7x, f32 on v5e/older

    # Dense channel slabs over (16*Wp sublanes, TN lanes); no sublane padding.
    x0 = x_ref[0].astype(cdt)
    x1 = x_ref[1].astype(cdt)
    x2 = x_ref[2].astype(cdt)

    # Hoisted scalar reads (single SMEM read each).
    bl = [bl_ref[o] for o in range(3)]
    wc = [[[wc_ref[o * 9 + c * 3 + k] for k in range(3)] for c in range(3)]
          for o in range(3)]
    bc = [bc_ref[o] for o in range(3)]

    # ---- Linear over channels (dense slabs, compute dtype) + 4x4 max pool -----
    pooled = []
    for o in range(3):
        w0 = wl_ref[o:o + 1, 0:1]           # (1,1) broadcast weights, compute dtype
        w1 = wl_ref[o:o + 1, 1:2]
        w2 = wl_ref[o:o + 1, 2:3]
        lin = (w0 * x0 + w1 * x1 + w2 * x2).astype(jnp.float32)   # (16*Wp, TN)
        # Max over the 16 pool offsets: tile-aligned groups of 16 sublanes.
        rows = [jnp.max(lin[w * n_pool:(w + 1) * n_pool, :], axis=0, keepdims=True)
                for w in range(wp)]
        pooled.append(jnp.concatenate(rows, axis=0) + bl[o])      # (Wp, TN) f32

    # ---- Conv2d (1x3, VALID) along W + bias + relu, f32 accumulation ----------
    # Hoist the 9 shifted input slices out of the output-channel loop.
    sh = [[pooled[ic][k:k + wout] for k in range(3)] for ic in range(3)]
    for oc in range(3):
        acc = bc[oc] + wc[oc][0][0] * sh[0][0]
        for ic in range(3):
            for k in range(3):
                if ic == 0 and k == 0:
                    continue
                acc = acc + wc[oc][ic][k] * sh[ic][k]
        o_ref[oc] = jnp.maximum(acc, 0.0).astype(o_ref.dtype)


def _round_up(a, b):
    return (a + b - 1) // b * b


def _device_kind():
    try:
        return jax.devices()[0].device_kind.lower()
    except Exception:
        return ""


def model_forward(x, wl, bl, wc, bc):
    """x: (B, H, W, 3) float16; returns (B, 3, H//4, W//4 - 2) float16."""
    B, H, W, Cin = x.shape
    assert Cin == 3 and H % 4 == 0 and W % 4 == 0 and W // 4 >= 3
    Hp, Wp = H // 4, W // 4
    Wout = Wp - 2
    N = B * Hp

    kind = _device_kind()
    # v5e/v5p and older have no packed bf16 VALU -> keep the f32 compute path there.
    use_bf16 = not any(f"v{g}" in kind for g in (2, 3, 4, 5))
    is_v7x = ("v7" in kind) or ("tpu7" in kind)
    compute_dtype = jnp.bfloat16 if use_bf16 else jnp.float32

    # ---- Lane-tile selection from a per-chip VMEM budget -----------------------
    lane_bytes = 3 * 16 * Wp * 2                       # bf16 input bytes per lane column
    in_budget = (12 << 20) if is_v7x else (28 << 20)   # double-buffered input budget
    TN = (in_budget // (2 * lane_bytes)) // 128 * 128
    TN = max(128, min(4096, TN))
    TN = min(TN, max(128, pl.cdiv(N, 128) * 128))      # don't tile far past N
    if N > 128:                                        # >=2 grid steps -> both v7x cores
        TN = min(TN, max(128, pl.cdiv(pl.cdiv(N, 2), 128) * 128))
    Npad = pl.cdiv(N, TN) * TN
    grid = (Npad // TN,)

    # ---- Host glue: one 6-D transpose, HBM traffic stays 16-bit ----------------
    # xk[c, wp*16 + ph*4 + pw, b*Hp + hp] = x[b, hp*4 + ph, wp*4 + pw, c]
    xk = x.astype(jnp.bfloat16).reshape(B, Hp, 4, Wp, 4, Cin)
    xk = jnp.transpose(xk, (5, 3, 2, 4, 0, 1))         # (3, Wp, 4, 4, B, Hp)
    xk = xk.reshape(3, 16 * Wp, N)
    if Npad != N:
        xk = jnp.pad(xk, ((0, 0), (0, 0), (0, Npad - N)))

    wl_k = wl.astype(compute_dtype)                    # (3, 3) VMEM, compute dtype
    bl32 = bl.astype(jnp.float32)                      # (3,)
    wc32 = wc.astype(jnp.float32).reshape(27)          # (3, 3, 1, 3) -> (27,)
    bc32 = bc.astype(jnp.float32)                      # (3,)

    # ---- VMEM limit derived from the actual footprints -------------------------
    in_block = 3 * 16 * Wp * TN * 2                    # bf16 input block
    out_block = 3 * _round_up(Wout, 16) * TN * 2       # bf16 output block (sublane-padded)
    itm = 2 if use_bf16 else 4
    tmp = (3 * 16 * Wp * TN * itm                      # x0..x2 slabs in compute dtype
           + 2 * 16 * Wp * TN * 4                      # live f32 `lin` slab (+ headroom)
           + 12 * _round_up(Wp, 8) * TN * 4)           # pooled + shifted f32 slices
    vmem_limit = 2 * in_block + 2 * out_block + tmp + (6 << 20)
    vmem_limit = max(24 << 20, min(vmem_limit, (56 << 20) if is_v7x else (100 << 20)))

    flops = (18 * 16 * Wp + 54 * Wout) * Npad
    bytes_accessed = (3 * 16 * Wp + 3 * Wout) * Npad * 2 + (9 + 3 + 27 + 3) * 4

    out = pl.pallas_call(
        fused_kernel,
        out_shape=jax.ShapeDtypeStruct((3, Wout, Npad), jnp.bfloat16),
        grid=grid,
        in_specs=[
            pl.BlockSpec((3, 16 * Wp, TN), lambda i: (0, 0, i)),     # activations
            pl.BlockSpec((3, 3), lambda i: (0, 0)),                  # linear weight (VMEM)
            pl.BlockSpec(memory_space=pltpu.MemorySpace.SMEM),       # linear bias
            pl.BlockSpec(memory_space=pltpu.MemorySpace.SMEM),       # conv weight (flat)
            pl.BlockSpec(memory_space=pltpu.MemorySpace.SMEM),       # conv bias
        ],
        out_specs=pl.BlockSpec((3, Wout, TN), lambda i: (0, 0, i)),
        compiler_params=pltpu.CompilerParams(
            dimension_semantics=("parallel",),
            vmem_limit_bytes=int(vmem_limit)),
        cost_estimate=pl.CostEstimate(
            flops=flops, transcendentals=0, bytes_accessed=bytes_accessed),
    )(xk, wl_k, bl32, wc32, bc32)

    # Glue: crop lane padding, back to PyTorch NCHW output layout, cast to f16.
    out = out[:, :, :N].reshape(3, Wout, B, Hp)
    out = jnp.transpose(out, (2, 0, 3, 1)).astype(jnp.float16)
    return out


def reference(x, wl, bl, wc, bc):
    """Pure-JAX reference (same math in f32, f16 output)."""
    xf = x.astype(jnp.float32)
    v1 = xf @ wl.astype(jnp.float32).T + bl.astype(jnp.float32)      # (B,H,W,3)
    v2 = jnp.transpose(v1, (0, 3, 1, 2))                             # NCHW
    B, C, H, W = v2.shape
    v3 = v2.reshape(B, C, H // 4, 4, W // 4, 4).max(axis=(3, 5))     # maxpool 4x4
    v4 = jax.lax.conv_general_dilated(
        v3, wc.astype(jnp.float32), window_strides=(1, 1), padding="VALID",
        dimension_numbers=("NCHW", "OIHW", "NCHW"))
    v4 = v4 + bc.astype(jnp.float32)[None, :, None, None]
    return jnp.maximum(v4, 0.0).astype(jnp.float16)


if __name__ == "__main__":
    key = jax.random.PRNGKey(0)
    kx, kwl, kbl, kwc, kbc = jax.random.split(key, 5)

    B, H, W, Cin = 2, 8, 16, 3   # small shapes consistent with the forward pass

    x = jax.random.normal(kx, (B, H, W, Cin), dtype=jnp.float32).astype(jnp.float16)

    # Deterministic PyTorch-style init (uniform +/- 1/sqrt(fan_in)), cast to f16 params.
    wl = (jax.random.uniform(kwl, (3, 3), minval=-1.0, maxval=1.0) / jnp.sqrt(3.0)).astype(jnp.float16)
    bl = (jax.random.uniform(kbl, (3,), minval=-1.0, maxval=1.0) / jnp.sqrt(3.0)).astype(jnp.float16)
    wc = (jax.random.uniform(kwc, (3, 3, 1, 3), minval=-1.0, maxval=1.0) / 3.0).astype(jnp.float16)
    bc = (jax.random.uniform(kbc, (3,), minval=-1.0, maxval=1.0) / 3.0).astype(jnp.float16)

    y = jax.jit(model_forward)(x, wl, bl, wc, bc)
    y = jax.block_until_ready(y)

    y_ref = reference(x, wl, bl, wc, bc)

    assert y.shape == (B, 3, H // 4, W // 4 - 2), y.shape
    assert y.dtype == jnp.float16, y.dtype
    if not jnp.allclose(y.astype(jnp.float32), y_ref.astype(jnp.float32), atol=5e-2, rtol=5e-2):
        raise AssertionError("Pallas kernel output mismatch vs JAX reference")

    print("KERNEL_OK")
</pallas_src>

<mosaic_0001>
module attributes {stable_mosaic.version = 11 : i64} {
  func.func @fused_kernel(%arg0: i32, %arg1: memref<3x64x128xbf16, #tpu.memory_space<vmem>>, %arg2: memref<3x3xbf16, #tpu.memory_space<vmem>>, %arg3: memref<3xf32, #tpu.memory_space<smem>>, %arg4: memref<27xf32, #tpu.memory_space<smem>>, %arg5: memref<3xf32, #tpu.memory_space<smem>>, %arg6: memref<3x2x128xbf16, #tpu.memory_space<vmem>>) attributes {dimension_semantics = [#tpu.dimension_semantics<parallel>], iteration_bounds = array<i64: 1>, scalar_prefetch = 0 : i64, scratch_operands = 0 : i64, tpu.core_type = #tpu.core_type<tc>, window_params = [{transform_indices = @transform_0, window_bounds = array<i64: 3, 64, 128>}, {pipeline_mode = #tpu.pipeline_mode<synchronous>, transform_indices = @transform_1, window_bounds = array<i64: 3, 3>}, {transform_indices = @transform_2, window_bounds = array<i64: 3>}, {transform_indices = @transform_3, window_bounds = array<i64: 27>}, {transform_indices = @transform_4, window_bounds = array<i64: 3>}, {transform_indices = @transform_5, window_bounds = array<i64: 3, 2, 128>}]} {
    %c0 = arith.constant 0 : index
    %c0_0 = arith.constant 0 : index
    %c0_1 = arith.constant 0 : index
    %0 = vector.load %arg1[%c0, %c0_0, %c0_1] : memref<3x64x128xbf16, #tpu.memory_space<vmem>>, vector<1x64x128xbf16>
    %1 = vector.shape_cast %0 : vector<1x64x128xbf16> to vector<64x128xbf16>
    %c1 = arith.constant 1 : index
    %c0_2 = arith.constant 0 : index
    %c0_3 = arith.constant 0 : index
    %2 = vector.load %arg1[%c1, %c0_2, %c0_3] : memref<3x64x128xbf16, #tpu.memory_space<vmem>>, vector<1x64x128xbf16>
    %3 = vector.shape_cast %2 : vector<1x64x128xbf16> to vector<64x128xbf16>
    %c2 = arith.constant 2 : index
    %c0_4 = arith.constant 0 : index
    %c0_5 = arith.constant 0 : index
    %4 = vector.load %arg1[%c2, %c0_4, %c0_5] : memref<3x64x128xbf16, #tpu.memory_space<vmem>>, vector<1x64x128xbf16>
    %5 = vector.shape_cast %4 : vector<1x64x128xbf16> to vector<64x128xbf16>
    %c0_6 = arith.constant 0 : index
    %6 = memref.load %arg3[%c0_6] : memref<3xf32, #tpu.memory_space<smem>>
    %c1_7 = arith.constant 1 : index
    %7 = memref.load %arg3[%c1_7] : memref<3xf32, #tpu.memory_space<smem>>
    %c2_8 = arith.constant 2 : index
    %8 = memref.load %arg3[%c2_8] : memref<3xf32, #tpu.memory_space<smem>>
    %c0_9 = arith.constant 0 : index
    %9 = memref.load %arg4[%c0_9] : memref<27xf32, #tpu.memory_space<smem>>
    %c1_10 = arith.constant 1 : index
    %10 = memref.load %arg4[%c1_10] : memref<27xf32, #tpu.memory_space<smem>>
    %c2_11 = arith.constant 2 : index
    %11 = memref.load %arg4[%c2_11] : memref<27xf32, #tpu.memory_space<smem>>
    %c3 = arith.constant 3 : index
    %12 = memref.load %arg4[%c3] : memref<27xf32, #tpu.memory_space<smem>>
    %c4 = arith.constant 4 : index
    %13 = memref.load %arg4[%c4] : memref<27xf32, #tpu.memory_space<smem>>
    %c5 = arith.constant 5 : index
    %14 = memref.load %arg4[%c5] : memref<27xf32, #tpu.memory_space<smem>>
    %c6 = arith.constant 6 : index
    %15 = memref.load %arg4[%c6] : memref<27xf32, #tpu.memory_space<smem>>
    %c7 = arith.constant 7 : index
    %16 = memref.load %arg4[%c7] : memref<27xf32, #tpu.memory_space<smem>>
    %c8 = arith.constant 8 : index
    %17 = memref.load %arg4[%c8] : memref<27xf32, #tpu.memory_space<smem>>
    %c9 = arith.constant 9 : index
    %18 = memref.load %arg4[%c9] : memref<27xf32, #tpu.memory_space<smem>>
    %c10 = arith.constant 10 : index
    %19 = memref.load %arg4[%c10] : memref<27xf32, #tpu.memory_space<smem>>
    %c11 = arith.constant 11 : index
    %20 = memref.load %arg4[%c11] : memref<27xf32, #tpu.memory_space<smem>>
    %c12 = arith.constant 12 : index
    %21 = memref.load %arg4[%c12] : memref<27xf32, #tpu.memory_space<smem>>
    %c13 = arith.constant 13 : index
    %22 = memref.load %arg4[%c13] : memref<27xf32, #tpu.memory_space<smem>>
    %c14 = arith.constant 14 : index
    %23 = memref.load %arg4[%c14] : memref<27xf32, #tpu.memory_space<smem>>
    %c15 = arith.constant 15 : index
    %24 = memref.load %arg4[%c15] : memref<27xf32, #tpu.memory_space<smem>>
    %c16 = arith.constant 16 : index
    %25 = memref.load %arg4[%c16] : memref<27xf32, #tpu.memory_space<smem>>
    %c17 = arith.constant 17 : index
    %26 = memref.load %arg4[%c17] : memref<27xf32, #tpu.memory_space<smem>>
    %c18 = arith.constant 18 : index
    %27 = memref.load %arg4[%c18] : memref<27xf32, #tpu.memory_space<smem>>
    %c19 = arith.constant 19 : index
    %28 = memref.load %arg4[%c19] : memref<27xf32, #tpu.memory_space<smem>>
    %c20 = arith.constant 20 : index
    %29 = memref.load %arg4[%c20] : memref<27xf32, #tpu.memory_space<smem>>
    %c21 = arith.constant 21 : index
    %30 = memref.load %arg4[%c21] : memref<27xf32, #tpu.memory_space<smem>>
    %c22 = arith.constant 22 : index
    %31 = memref.load %arg4[%c22] : memref<27xf32, #tpu.memory_space<smem>>
    %c23 = arith.constant 23 : index
    %32 = memref.load %arg4[%c23] : memref<27xf32, #tpu.memory_space<smem>>
    %c24 = arith.constant 24 : index
    %33 = memref.load %arg4[%c24] : memref<27xf32, #tpu.memory_space<smem>>
    %c25 = arith.constant 25 : index
    %34 = memref.load %arg4[%c25] : memref<27xf32, #tpu.memory_space<smem>>
    %c26 = arith.constant 26 : index
    %35 = memref.load %arg4[%c26] : memref<27xf32, #tpu.memory_space<smem>>
    %c0_12 = arith.constant 0 : index
    %36 = memref.load %arg5[%c0_12] : memref<3xf32, #tpu.memory_space<smem>>
    %c1_13 = arith.constant 1 : index
    %37 = memref.load %arg5[%c1_13] : memref<3xf32, #tpu.memory_space<smem>>
    %c2_14 = arith.constant 2 : index
    %38 = memref.load %arg5[%c2_14] : memref<3xf32, #tpu.memory_space<smem>>
    %c0_15 = arith.constant 0 : index
    %c0_16 = arith.constant 0 : index
    %39 = vector.load %arg2[%c0_15, %c0_16] : memref<3x3xbf16, #tpu.memory_space<vmem>>, vector<1x1xbf16>
    %c0_17 = arith.constant 0 : index
    %c1_18 = arith.constant 1 : index
    %40 = vector.load %arg2[%c0_17, %c1_18] : memref<3x3xbf16, #tpu.memory_space<vmem>>, vector<1x1xbf16>
    %c0_19 = arith.constant 0 : index
    %c2_20 = arith.constant 2 : index
    %41 = vector.load %arg2[%c0_19, %c2_20] : memref<3x3xbf16, #tpu.memory_space<vmem>>, vector<1x1xbf16>
    %42 = vector.broadcast %39 : vector<1x1xbf16> to vector<64x128xbf16>
    %43 = arith.mulf %42, %1 : vector<64x128xbf16>
    %44 = vector.broadcast %40 : vector<1x1xbf16> to vector<64x128xbf16>
    %45 = arith.mulf %44, %3 : vector<64x128xbf16>
    %46 = arith.addf %43, %45 : vector<64x128xbf16>
    %47 = vector.broadcast %41 : vector<1x1xbf16> to vector<64x128xbf16>
    %48 = arith.mulf %47, %5 : vector<64x128xbf16>
    %49 = arith.addf %46, %48 : vector<64x128xbf16>
    %50 = arith.extf %49 : vector<64x128xbf16> to vector<64x128xf32>
    %51 = vector.extract_strided_slice %50 {offsets = [0, 0], sizes = [16, 128], strides = [1, 1]} : vector<64x128xf32> to vector<16x128xf32>
    %cst = arith.constant dense<0xFF800000> : vector<128xf32>
    %52 = vector.multi_reduction <maximumf>, %51, %cst [0] : vector<16x128xf32> to vector<128xf32>
    %53 = vector.shape_cast %52 : vector<128xf32> to vector<1x128xf32>
    %54 = vector.extract_strided_slice %50 {offsets = [16, 0], sizes = [16, 128], strides = [1, 1]} : vector<64x128xf32> to vector<16x128xf32>
    %cst_21 = arith.constant dense<0xFF800000> : vector<128xf32>
    %55 = vector.multi_reduction <maximumf>, %54, %cst_21 [0] : vector<16x128xf32> to vector<128xf32>
    %56 = vector.shape_cast %55 : vector<128xf32> to vector<1x128xf32>
    %57 = vector.extract_strided_slice %50 {offsets = [32, 0], sizes = [16, 128], strides = [1, 1]} : vector<64x128xf32> to vector<16x128xf32>
    %cst_22 = arith.constant dense<0xFF800000> : vector<128xf32>
    %58 = vector.multi_reduction <maximumf>, %57, %cst_22 [0] : vector<16x128xf32> to vector<128xf32>
    %59 = vector.shape_cast %58 : vector<128xf32> to vector<1x128xf32>
    %60 = vector.extract_strided_slice %50 {offsets = [48, 0], sizes = [16, 128], strides = [1, 1]} : vector<64x128xf32> to vector<16x128xf32>
    %cst_23 = arith.constant dense<0xFF800000> : vector<128xf32>
    %61 = vector.multi_reduction <maximumf>, %60, %cst_23 [0] : vector<16x128xf32> to vector<128xf32>
    %62 = vector.shape_cast %61 : vector<128xf32> to vector<1x128xf32>
    %63 = tpu.concatenate %53, %56, %59, %62 in 0 : vector<1x128xf32>, vector<1x128xf32>, vector<1x128xf32>, vector<1x128xf32> -> vector<4x128xf32>
    %64 = vector.broadcast %6 : f32 to vector<4x128xf32>
    %65 = arith.addf %63, %64 : vector<4x128xf32>
    %c1_24 = arith.constant 1 : index
    %c0_25 = arith.constant 0 : index
    %66 = vector.load %arg2[%c1_24, %c0_25] : memref<3x3xbf16, #tpu.memory_space<vmem>>, vector<1x1xbf16>
    %c1_26 = arith.constant 1 : index
    %c1_27 = arith.constant 1 : index
    %67 = vector.load %arg2[%c1_26, %c1_27] : memref<3x3xbf16, #tpu.memory_space<vmem>>, vector<1x1xbf16>
    %c1_28 = arith.constant 1 : index
    %c2_29 = arith.constant 2 : index
    %68 = vector.load %arg2[%c1_28, %c2_29] : memref<3x3xbf16, #tpu.memory_space<vmem>>, vector<1x1xbf16>
    %69 = vector.broadcast %66 : vector<1x1xbf16> to vector<64x128xbf16>
    %70 = arith.mulf %69, %1 : vector<64x128xbf16>
    %71 = vector.broadcast %67 : vector<1x1xbf16> to vector<64x128xbf16>
    %72 = arith.mulf %71, %3 : vector<64x128xbf16>
    %73 = arith.addf %70, %72 : vector<64x128xbf16>
    %74 = vector.broadcast %68 : vector<1x1xbf16> to vector<64x128xbf16>
    %75 = arith.mulf %74, %5 : vector<64x128xbf16>
    %76 = arith.addf %73, %75 : vector<64x128xbf16>
    %77 = arith.extf %76 : vector<64x128xbf16> to vector<64x128xf32>
    %78 = vector.extract_strided_slice %77 {offsets = [0, 0], sizes = [16, 128], strides = [1, 1]} : vector<64x128xf32> to vector<16x128xf32>
    %cst_30 = arith.constant dense<0xFF800000> : vector<128xf32>
    %79 = vector.multi_reduction <maximumf>, %78, %cst_30 [0] : vector<16x128xf32> to vector<128xf32>
    %80 = vector.shape_cast %79 : vector<128xf32> to vector<1x128xf32>
    %81 = vector.extract_strided_slice %77 {offsets = [16, 0], sizes = [16, 128], strides = [1, 1]} : vector<64x128xf32> to vector<16x128xf32>
    %cst_31 = arith.constant dense<0xFF800000> : vector<128xf32>
    %82 = vector.multi_reduction <maximumf>, %81, %cst_31 [0] : vector<16x128xf32> to vector<128xf32>
    %83 = vector.shape_cast %82 : vector<128xf32> to vector<1x128xf32>
    %84 = vector.extract_strided_slice %77 {offsets = [32, 0], sizes = [16, 128], strides = [1, 1]} : vector<64x128xf32> to vector<16x128xf32>
    %cst_32 = arith.constant dense<0xFF800000> : vector<128xf32>
    %85 = vector.multi_reduction <maximumf>, %84, %cst_32 [0] : vector<16x128xf32> to vector<128xf32>
    %86 = vector.shape_cast %85 : vector<128xf32> to vector<1x128xf32>
    %87 = vector.extract_strided_slice %77 {offsets = [48, 0], sizes = [16, 128], strides = [1, 1]} : vector<64x128xf32> to vector<16x128xf32>
    %cst_33 = arith.constant dense<0xFF800000> : vector<128xf32>
    %88 = vector.multi_reduction <maximumf>, %87, %cst_33 [0] : vector<16x128xf32> to vector<128xf32>
    %89 = vector.shape_cast %88 : vector<128xf32> to vector<1x128xf32>
    %90 = tpu.concatenate %80, %83, %86, %89 in 0 : vector<1x128xf32>, vector<1x128xf32>, vector<1x128xf32>, vector<1x128xf32> -> vector<4x128xf32>
    %91 = vector.broadcast %7 : f32 to vector<4x128xf32>
    %92 = arith.addf %90, %91 : vector<4x128xf32>
    %c2_34 = arith.constant 2 : index
    %c0_35 = arith.constant 0 : index
    %93 = vector.load %arg2[%c2_34, %c0_35] : memref<3x3xbf16, #tpu.memory_space<vmem>>, vector<1x1xbf16>
    %c2_36 = arith.constant 2 : index
    %c1_37 = arith.constant 1 : index
    %94 = vector.load %arg2[%c2_36, %c1_37] : memref<3x3xbf16, #tpu.memory_space<vmem>>, vector<1x1xbf16>
    %c2_38 = arith.constant 2 : index
    %c2_39 = arith.constant 2 : index
    %95 = vector.load %arg2[%c2_38, %c2_39] : memref<3x3xbf16, #tpu.memory_space<vmem>>, vector<1x1xbf16>
    %96 = vector.broadcast %93 : vector<1x1xbf16> to vector<64x128xbf16>
    %97 = arith.mulf %96, %1 : vector<64x128xbf16>
    %98 = vector.broadcast %94 : vector<1x1xbf16> to vector<64x128xbf16>
    %99 = arith.mulf %98, %3 : vector<64x128xbf16>
    %100 = arith.addf %97, %99 : vector<64x128xbf16>
    %101 = vector.broadcast %95 : vector<1x1xbf16> to vector<64x128xbf16>
    %102 = arith.mulf %101, %5 : vector<64x128xbf16>
    %103 = arith.addf %100, %102 : vector<64x128xbf16>
    %104 = arith.extf %103 : vector<64x128xbf16> to vector<64x128xf32>
    %105 = vector.extract_strided_slice %104 {offsets = [0, 0], sizes = [16, 128], strides = [1, 1]} : vector<64x128xf32> to vector<16x128xf32>
    %cst_40 = arith.constant dense<0xFF800000> : vector<128xf32>
    %106 = vector.multi_reduction <maximumf>, %105, %cst_40 [0] : vector<16x128xf32> to vector<128xf32>
    %107 = vector.shape_cast %106 : vector<128xf32> to vector<1x128xf32>
    %108 = vector.extract_strided_slice %104 {offsets = [16, 0], sizes = [16, 128], strides = [1, 1]} : vector<64x128xf32> to vector<16x128xf32>
    %cst_41 = arith.constant dense<0xFF800000> : vector<128xf32>
    %109 = vector.multi_reduction <maximumf>, %108, %cst_41 [0] : vector<16x128xf32> to vector<128xf32>
    %110 = vector.shape_cast %109 : vector<128xf32> to vector<1x128xf32>
    %111 = vector.extract_strided_slice %104 {offsets = [32, 0], sizes = [16, 128], strides = [1, 1]} : vector<64x128xf32> to vector<16x128xf32>
    %cst_42 = arith.constant dense<0xFF800000> : vector<128xf32>
    %112 = vector.multi_reduction <maximumf>, %111, %cst_42 [0] : vector<16x128xf32> to vector<128xf32>
    %113 = vector.shape_cast %112 : vector<128xf32> to vector<1x128xf32>
    %114 = vector.extract_strided_slice %104 {offsets = [48, 0], sizes = [16, 128], strides = [1, 1]} : vector<64x128xf32> to vector<16x128xf32>
    %cst_43 = arith.constant dense<0xFF800000> : vector<128xf32>
    %115 = vector.multi_reduction <maximumf>, %114, %cst_43 [0] : vector<16x128xf32> to vector<128xf32>
    %116 = vector.shape_cast %115 : vector<128xf32> to vector<1x128xf32>
    %117 = tpu.concatenate %107, %110, %113, %116 in 0 : vector<1x128xf32>, vector<1x128xf32>, vector<1x128xf32>, vector<1x128xf32> -> vector<4x128xf32>
    %118 = vector.broadcast %8 : f32 to vector<4x128xf32>
    %119 = arith.addf %117, %118 : vector<4x128xf32>
    %120 = vector.extract_strided_slice %65 {offsets = [0, 0], sizes = [2, 128], strides = [1, 1]} : vector<4x128xf32> to vector<2x128xf32>
    %121 = vector.extract_strided_slice %65 {offsets = [1, 0], sizes = [2, 128], strides = [1, 1]} : vector<4x128xf32> to vector<2x128xf32>
    %122 = vector.extract_strided_slice %65 {offsets = [2, 0], sizes = [2, 128], strides = [1, 1]} : vector<4x128xf32> to vector<2x128xf32>
    %123 = vector.extract_strided_slice %92 {offsets = [0, 0], sizes = [2, 128], strides = [1, 1]} : vector<4x128xf32> to vector<2x128xf32>
    %124 = vector.extract_strided_slice %92 {offsets = [1, 0], sizes = [2, 128], strides = [1, 1]} : vector<4x128xf32> to vector<2x128xf32>
    %125 = vector.extract_strided_slice %92 {offsets = [2, 0], sizes = [2, 128], strides = [1, 1]} : vector<4x128xf32> to vector<2x128xf32>
    %126 = vector.extract_strided_slice %119 {offsets = [0, 0], sizes = [2, 128], strides = [1, 1]} : vector<4x128xf32> to vector<2x128xf32>
    %127 = vector.extract_strided_slice %119 {offsets = [1, 0], sizes = [2, 128], strides = [1, 1]} : vector<4x128xf32> to vector<2x128xf32>
    %128 = vector.extract_strided_slice %119 {offsets = [2, 0], sizes = [2, 128], strides = [1, 1]} : vector<4x128xf32> to vector<2x128xf32>
    %129 = vector.broadcast %9 : f32 to vector<2x128xf32>
    %130 = arith.mulf %129, %120 : vector<2x128xf32>
    %131 = vector.broadcast %36 : f32 to vector<2x128xf32>
    %132 = arith.addf %131, %130 : vector<2x128xf32>
    %133 = vector.broadcast %10 : f32 to vector<2x128xf32>
    %134 = arith.mulf %133, %121 : vector<2x128xf32>
    %135 = arith.addf %132, %134 : vector<2x128xf32>
    %136 = vector.broadcast %11 : f32 to vector<2x128xf32>
    %137 = arith.mulf %136, %122 : vector<2x128xf32>
    %138 = arith.addf %135, %137 : vector<2x128xf32>
    %139 = vector.broadcast %12 : f32 to vector<2x128xf32>
    %140 = arith.mulf %139, %123 : vector<2x128xf32>
    %141 = arith.addf %138, %140 : vector<2x128xf32>
    %142 = vector.broadcast %13 : f32 to vector<2x128xf32>
    %143 = arith.mulf %142, %124 : vector<2x128xf32>
    %144 = arith.addf %141, %143 : vector<2x128xf32>
    %145 = vector.broadcast %14 : f32 to vector<2x128xf32>
    %146 = arith.mulf %145, %125 : vector<2x128xf32>
    %147 = arith.addf %144, %146 : vector<2x128xf32>
    %148 = vector.broadcast %15 : f32 to vector<2x128xf32>
    %149 = arith.mulf %148, %126 : vector<2x128xf32>
    %150 = arith.addf %147, %149 : vector<2x128xf32>
    %151 = vector.broadcast %16 : f32 to vector<2x128xf32>
    %152 = arith.mulf %151, %127 : vector<2x128xf32>
    %153 = arith.addf %150, %152 : vector<2x128xf32>
    %154 = vector.broadcast %17 : f32 to vector<2x128xf32>
    %155 = arith.mulf %154, %128 : vector<2x128xf32>
    %156 = arith.addf %153, %155 : vector<2x128xf32>
    %cst_44 = arith.constant 0.000000e+00 : f32
    %157 = vector.broadcast %cst_44 : f32 to vector<2x128xf32>
    %158 = arith.maximumf %156, %157 : vector<2x128xf32>
    %159 = arith.truncf %158 : vector<2x128xf32> to vector<2x128xbf16>
    %c0_45 = arith.constant 0 : index
    %c0_46 = arith.constant 0 : index
    %c0_47 = arith.constant 0 : index
    %160 = vector.load %arg6[%c0_45, %c0_46, %c0_47] : memref<3x2x128xbf16, #tpu.memory_space<vmem>>, vector<1x2x128xbf16>
    %161 = vector.shape_cast %160 : vector<1x2x128xbf16> to vector<2x128xbf16>
    %162 = vector.shape_cast %159 : vector<2x128xbf16> to vector<1x2x128xbf16>
    tpu.vector_store %arg6[%c0_45, %c0_46, %c0_47], %162 {strides = array<i32>} : memref<3x2x128xbf16, #tpu.memory_space<vmem>>, vector<1x2x128xbf16>,
    %163 = vector.broadcast %18 : f32 to vector<2x128xf32>
    %164 = arith.mulf %163, %120 : vector<2x128xf32>
    %165 = vector.broadcast %37 : f32 to vector<2x128xf32>
    %166 = arith.addf %165, %164 : vector<2x128xf32>
    %167 = vector.broadcast %19 : f32 to vector<2x128xf32>
    %168 = arith.mulf %167, %121 : vector<2x128xf32>
    %169 = arith.addf %166, %168 : vector<2x128xf32>
    %170 = vector.broadcast %20 : f32 to vector<2x128xf32>
    %171 = arith.mulf %170, %122 : vector<2x128xf32>
    %172 = arith.addf %169, %171 : vector<2x128xf32>
    %173 = vector.broadcast %21 : f32 to vector<2x128xf32>
    %174 = arith.mulf %173, %123 : vector<2x128xf32>
    %175 = arith.addf %172, %174 : vector<2x128xf32>
    %176 = vector.broadcast %22 : f32 to vector<2x128xf32>
    %177 = arith.mulf %176, %124 : vector<2x128xf32>
    %178 = arith.addf %175, %177 : vector<2x128xf32>
    %179 = vector.broadcast %23 : f32 to vector<2x128xf32>
    %180 = arith.mulf %179, %125 : vector<2x128xf32>
    %181 = arith.addf %178, %180 : vector<2x128xf32>
    %182 = vector.broadcast %24 : f32 to vector<2x128xf32>
    %183 = arith.mulf %182, %126 : vector<2x128xf32>
    %184 = arith.addf %181, %183 : vector<2x128xf32>
    %185 = vector.broadcast %25 : f32 to vector<2x128xf32>
    %186 = arith.mulf %185, %127 : vector<2x128xf32>
    %187 = arith.addf %184, %186 : vector<2x128xf32>
    %188 = vector.broadcast %26 : f32 to vector<2x128xf32>
    %189 = arith.mulf %188, %128 : vector<2x128xf32>
    %190 = arith.addf %187, %189 : vector<2x128xf32>
    %cst_48 = arith.constant 0.000000e+00 : f32
    %191 = vector.broadcast %cst_48 : f32 to vector<2x128xf32>
    %192 = arith.maximumf %190, %191 : vector<2x128xf32>
    %193 = arith.truncf %192 : vector<2x128xf32> to vector<2x128xbf16>
    %c1_49 = arith.constant 1 : index
    %c0_50 = arith.constant 0 : index
    %c0_51 = arith.constant 0 : index
    %194 = vector.load %arg6[%c1_49, %c0_50, %c0_51] : memref<3x2x128xbf16, #tpu.memory_space<vmem>>, vector<1x2x128xbf16>
    %195 = vector.shape_cast %194 : vector<1x2x128xbf16> to vector<2x128xbf16>
    %196 = vector.shape_cast %193 : vector<2x128xbf16> to vector<1x2x128xbf16>
    tpu.vector_store %arg6[%c1_49, %c0_50, %c0_51], %196 {strides = array<i32>} : memref<3x2x128xbf16, #tpu.memory_space<vmem>>, vector<1x2x128xbf16>,
    %197 = vector.broadcast %27 : f32 to vector<2x128xf32>
    %198 = arith.mulf %197, %120 : vector<2x128xf32>
    %199 = vector.broadcast %38 : f32 to vector<2x128xf32>
    %200 = arith.addf %199, %198 : vector<2x128xf32>
    %201 = vector.broadcast %28 : f32 to vector<2x128xf32>
    %202 = arith.mulf %201, %121 : vector<2x128xf32>
    %203 = arith.addf %200, %202 : vector<2x128xf32>
    %204 = vector.broadcast %29 : f32 to vector<2x128xf32>
    %205 = arith.mulf %204, %122 : vector<2x128xf32>
    %206 = arith.addf %203, %205 : vector<2x128xf32>
    %207 = vector.broadcast %30 : f32 to vector<2x128xf32>
    %208 = arith.mulf %207, %123 : vector<2x128xf32>
    %209 = arith.addf %206, %208 : vector<2x128xf32>
    %210 = vector.broadcast %31 : f32 to vector<2x128xf32>
    %211 = arith.mulf %210, %124 : vector<2x128xf32>
    %212 = arith.addf %209, %211 : vector<2x128xf32>
    %213 = vector.broadcast %32 : f32 to vector<2x128xf32>
    %214 = arith.mulf %213, %125 : vector<2x128xf32>
    %215 = arith.addf %212, %214 : vector<2x128xf32>
    %216 = vector.broadcast %33 : f32 to vector<2x128xf32>
    %217 = arith.mulf %216, %126 : vector<2x128xf32>
    %218 = arith.addf %215, %217 : vector<2x128xf32>
    %219 = vector.broadcast %34 : f32 to vector<2x128xf32>
    %220 = arith.mulf %219, %127 : vector<2x128xf32>
    %221 = arith.addf %218, %220 : vector<2x128xf32>
    %222 = vector.broadcast %35 : f32 to vector<2x128xf32>
    %223 = arith.mulf %222, %128 : vector<2x128xf32>
    %224 = arith.addf %221, %223 : vector<2x128xf32>
    %cst_52 = arith.constant 0.000000e+00 : f32
    %225 = vector.broadcast %cst_52 : f32 to vector<2x128xf32>
    %226 = arith.maximumf %224, %225 : vector<2x128xf32>
    %227 = arith.truncf %226 : vector<2x128xf32> to vector<2x128xbf16>
    %c2_53 = arith.constant 2 : index
    %c0_54 = arith.constant 0 : index
    %c0_55 = arith.constant 0 : index
    %228 = vector.load %arg6[%c2_53, %c0_54, %c0_55] : memref<3x2x128xbf16, #tpu.memory_space<vmem>>, vector<1x2x128xbf16>
    %229 = vector.shape_cast %228 : vector<1x2x128xbf16> to vector<2x128xbf16>
    %230 = vector.shape_cast %227 : vector<2x128xbf16> to vector<1x2x128xbf16>
    tpu.vector_store %arg6[%c2_53, %c0_54, %c0_55], %230 {strides = array<i32>} : memref<3x2x128xbf16, #tpu.memory_space<vmem>>, vector<1x2x128xbf16>,
    return
  }
  func.func @transform_0(%arg0: i32) -> (i32, i32, i32) {
    %c0_i32 = arith.constant 0 : i32
    %c0_i32_0 = arith.constant 0 : i32
    %c0_i32_1 = arith.constant 0 : i32
    return %c0_i32, %c0_i32_0, %arg0 : i32, i32, i32
  }
  func.func @transform_1(%arg0: i32) -> (i32, i32) {
    %c0_i32 = arith.constant 0 : i32
    %c0_i32_0 = arith.constant 0 : i32
    %c0_i32_1 = arith.constant 0 : i32
    return %c0_i32, %c0_i32_0 : i32, i32
  }
  func.func @transform_2(%arg0: i32) -> i32 {
    %c0_i32 = arith.constant 0 : i32
    %c0_i32_0 = arith.constant 0 : i32
    return %c0_i32 : i32
  }
  func.func @transform_3(%arg0: i32) -> i32 {
    %c0_i32 = arith.constant 0 : i32
    %c0_i32_0 = arith.constant 0 : i32
    return %c0_i32 : i32
  }
  func.func @transform_4(%arg0: i32) -> i32 {
    %c0_i32 = arith.constant 0 : i32
    %c0_i32_0 = arith.constant 0 : i32
    return %c0_i32 : i32
  }
  func.func @transform_5(%arg0: i32) -> (i32, i32, i32) {
    %c0_i32 = arith.constant 0 : i32
    %c0_i32_0 = arith.constant 0 : i32
    %c0_i32_1 = arith.constant 0 : i32
    return %c0_i32, %c0_i32_0, %arg0 : i32, i32, i32
  }
}

</mosaic_0001>

<llo_original>
// kernel: model_forward.1
$region0: #{model_forward.1}
  #allocation0 [shape = 'u32[]', space=smem, size = 0x4, offset = 0x4, fixed_abs, tag = 'smem constant byte address 0x4 - core index']
  #allocation1 [shape = 'u32[144,128]{1,0:T(1,128)}', space=vmem, size = 0x12000, scoped, tag = 'internal scratch']
  %s0 = inlined_call_operand.vmem [shape: bf16[3,64,128], index: 0, kind: input, shape index: {}]
  %s1 = inlined_call_operand.vmem [shape: bf16[3,3], index: 1, kind: input, shape index: {}]
  %s2 = inlined_call_operand.vmem [shape: f32[3], index: 2, kind: input, shape index: {}]
  %s3 = inlined_call_operand.vmem [shape: f32[27], index: 3, kind: input, shape index: {}]
  %s4 = inlined_call_operand.vmem [shape: f32[3], index: 4, kind: input, shape index: {}]
  %s5 = inlined_call_operand.vmem [shape: bf16[3,2,128], index: 5, kind: output, shape index: {}]
  %s6 = sld [smem:[#allocation0]]
  $region42: #{model_forward.1} parent=0
    _
  %s8 = ssub.s32 1, %s6
  %s9 = scalar_select 0, %s8, %s6
  $region1: #{model_forward.1} parent=0
    #allocation2 [shape = 'u8[512]{0}', space=smem, size = 0x200, scoped, tag = 'input window, operand 2, single buffered']
    #allocation3 [shape = 's32[1]{0}', space=sflag, size = 0x4, scoped, tag = 'scoped memory for model_forward.1']
    #allocation4 [shape = 'u8[512]{0}', space=smem, size = 0x200, scoped, tag = 'input window, operand 3, single buffered']
    #allocation5 [shape = 's32[1]{0}', space=sflag, size = 0x4, scoped, tag = 'scoped memory for model_forward.1']
    #allocation6 [shape = 'u8[512]{0}', space=smem, size = 0x200, scoped, tag = 'input window, operand 4, single buffered']
    %10 = vsyncpa [#allocation3], 0
    %11 = vsyncpa [#allocation5], 0
    // Predicated region
    $region2: #{model_forward.1} parent=1 // pred_check
      _
    $region3: #{model_forward.1} parent=1 // pred_check_branch
      %13 = sbr.rel (0) target = $region5
    $region4: #{model_forward.1} parent=1 // pred_region
      _
    $region5: #{model_forward.1} parent=1 // pred_fallthru
      _
    // Predicated region
    $region6: #{model_forward.1} parent=1 // pred_check
      _
    $region7: #{model_forward.1} parent=1 // pred_check_branch
      %15 = sbr.rel (0) target = $region9
    $region8: #{model_forward.1} parent=1 // pred_region
      _
    $region9: #{model_forward.1} parent=1 // pred_fallthru
      _
    // Predicated region
    $region10: #{model_forward.1} parent=1 // pred_check
      _
    $region11: #{model_forward.1} parent=1 // pred_check_branch
      %17 = sbr.rel (0) target = $region13
    $region12: #{model_forward.1} parent=1 // pred_region
      %s19 = ssub.s32 16, 16
      %20 = vsyncadd [#allocation3], %s19
      %s22 = sshll.u32 %s2, 4
      %s23 = int_to_ptr.vmem [resolvable:$true] %s22
      %25 = dma.vmem_to_smem %s23, 16, [#allocation2], [#allocation3]
    $region13: #{model_forward.1} parent=1 // pred_fallthru
      _
    // Predicated region
    $region14: #{model_forward.1} parent=1 // pred_check
      _
    $region15: #{model_forward.1} parent=1 // pred_check_branch
      %27 = sbr.rel (0) target = $region17
    $region16: #{model_forward.1} parent=1 // pred_region
      %s29 = ssub.s32 16, 16
      %30 = vsyncadd [#allocation5], %s29
      %s32 = sshll.u32 %s3, 4
      %s33 = int_to_ptr.vmem [resolvable:$true] %s32
      %35 = dma.vmem_to_smem %s33, 16, [#allocation4], [#allocation5]
    $region17: #{model_forward.1} parent=1 // pred_fallthru
      _
    // Predicated region
    $region18: #{model_forward.1} parent=1 // pred_check
      _
    $region19: #{model_forward.1} parent=1 // pred_check_branch
      %37 = sbr.rel (0) target = $region21
    $region20: #{model_forward.1} parent=1 // pred_region
      %s39 = ssub.s32 16, 16
      %40 = vsyncadd [#allocation5], %s39
      %s42 = sshll.u32 %s4, 4
      %s43 = int_to_ptr.vmem [resolvable:$true] %s42
      %45 = dma.vmem_to_smem %s43, 16, [#allocation6], [#allocation5]
    $region21: #{model_forward.1} parent=1 // pred_fallthru
      _
    // Predicated region
    $region22: #{model_forward.1} parent=1 // pred_check
      _
    $region23: #{model_forward.1} parent=1 // pred_check_branch
      %47 = sbr.rel (0) target = $region25
    $region24: #{model_forward.1} parent=1 // pred_region
      %48 = dma.done [#allocation3], 16
    $region25: #{model_forward.1} parent=1 // pred_fallthru
      _
    // Predicated region
    $region26: #{model_forward.1} parent=1 // pred_check
      _
    $region27: #{model_forward.1} parent=1 // pred_check_branch
      %50 = sbr.rel (0) target = $region29
    $region28: #{model_forward.1} parent=1 // pred_region
      %51 = dma.done [#allocation5], 16
    $region29: #{model_forward.1} parent=1 // pred_fallthru
      _
    // Predicated region
    $region30: #{model_forward.1} parent=1 // pred_check
      _
    $region31: #{model_forward.1} parent=1 // pred_check_branch
      %53 = sbr.rel (0) target = $region33
    $region32: #{model_forward.1} parent=1 // pred_region
      %54 = dma.done [#allocation5], 16
    $region33: #{model_forward.1} parent=1 // pred_fallthru
      _
    %55 = sfence
    %v56 = vld [vmem:[%s0] sm:$0xf]
    %v57 = vld [vmem:[%s0 + $0x4] sm:$0xf]
    %v58 = vld [vmem:[%s0 + $0x8] sm:$0xf]
    %v59 = vld [vmem:[%s0 + $0xc] sm:$0xf]
    %v60 = vld [vmem:[%s0 + $0x10] sm:$0xf]
    %v61 = vld [vmem:[%s0 + $0x14] sm:$0xf]
    %v62 = vld [vmem:[%s0 + $0x18] sm:$0xf]
    %v63 = vld [vmem:[%s0 + $0x1c] sm:$0xf]
    %s64 = scalar_lea.vmem %s0, 32
    %v65 = vld [vmem:[%s64] sm:$0xf]
    %v66 = vld [vmem:[%s64 + $0x4] sm:$0xf]
    %v67 = vld [vmem:[%s64 + $0x8] sm:$0xf]
    %v68 = vld [vmem:[%s64 + $0xc] sm:$0xf]
    %v69 = vld [vmem:[%s64 + $0x10] sm:$0xf]
    %v70 = vld [vmem:[%s64 + $0x14] sm:$0xf]
    %v71 = vld [vmem:[%s64 + $0x18] sm:$0xf]
    %v72 = vld [vmem:[%s64 + $0x1c] sm:$0xf]
    %s73 = scalar_lea.vmem %s0, 64
    %v74 = vld [vmem:[%s73] sm:$0xf]
    %v75 = vld [vmem:[%s73 + $0x4] sm:$0xf]
    %v76 = vld [vmem:[%s73 + $0x8] sm:$0xf]
    %v77 = vld [vmem:[%s73 + $0xc] sm:$0xf]
    %v78 = vld [vmem:[%s73 + $0x10] sm:$0xf]
    %v79 = vld [vmem:[%s73 + $0x14] sm:$0xf]
    %v80 = vld [vmem:[%s73 + $0x18] sm:$0xf]
    %v81 = vld [vmem:[%s73 + $0x1c] sm:$0xf]
    %s82 = sld [smem:[#allocation2]]
    %s83 = sld [smem:[#allocation2 + $0x1]]
    %s84 = sld [smem:[#allocation2 + $0x2]]
    %s85 = sld [smem:[#allocation4]]
    %s86 = sld [smem:[#allocation4 + $0x1]]
    %s87 = sld [smem:[#allocation4 + $0x2]]
    %s88 = sld [smem:[#allocation4 + $0x3]]
    %s89 = sld [smem:[#allocation4 + $0x4]]
    %s90 = sld [smem:[#allocation4 + $0x5]]
    %s91 = sld [smem:[#allocation4 + $0x6]]
    %s92 = sld [smem:[#allocation4 + $0x7]]
    %s93 = sld [smem:[#allocation4 + $0x8]]
    %s94 = sld [smem:[#allocation4 + $0x9]]
    %s95 = sld [smem:[#allocation4 + $0xa]]
    %s96 = sld [smem:[#allocation4 + $0xb]]
    %s97 = sld [smem:[#allocation4 + $0xc]]
    %s98 = sld [smem:[#allocation4 + $0xd]]
    %s99 = sld [smem:[#allocation4 + $0xe]]
    %s100 = sld [smem:[#allocation4 + $0xf]]
    %s101 = sld [smem:[#allocation4 + $0x10]]
    %s102 = sld [smem:[#allocation4 + $0x11]]
    %s103 = sld [smem:[#allocation4 + $0x12]]
    %s104 = sld [smem:[#allocation4 + $0x13]]
    %s105 = sld [smem:[#allocation4 + $0x14]]
    %s106 = sld [smem:[#allocation4 + $0x15]]
    %s107 = sld [smem:[#allocation4 + $0x16]]
    %s108 = sld [smem:[#allocation4 + $0x17]]
    %s109 = sld [smem:[#allocation4 + $0x18]]
    %s110 = sld [smem:[#allocation4 + $0x19]]
    %s111 = sld [smem:[#allocation4 + $0x1a]]
    %s112 = sld [smem:[#allocation6]]
    %s113 = sld [smem:[#allocation6 + $0x1]]
    %s114 = sld [smem:[#allocation6 + $0x2]]
    %v115 = vld [vmem:[%s1] sm:$0x1]
    %s117 = vtos %v115
    %v118 = vstv %s117
    %v119 = vpack.i.b16 %v118, %v118
    %v121 = vmul.bf16 %v119, %v56
    %v122 = vmul.bf16 %v119, %v57
    %v123 = vmul.bf16 %v119, %v58
    %v124 = vmul.bf16 %v119, %v59
    %v125 = vmul.bf16 %v119, %v60
    %v126 = vmul.bf16 %v119, %v61
    %v127 = vmul.bf16 %v119, %v62
    %v128 = vmul.bf16 %v119, %v63
    %v131 = vunpack.c.l.s4 1983009808
    %v132 = vunpack.c.0.s8 %v131
    %v133 = vlaneseq
    %v134 = vshrl.u32 %v133, 7
    %v135 = vsub.s32 %v132, %v134
    %v136 = vrot.slane %v115, %v135
    %137 = vrot.lane.b32.xlu0 %v136, 127
    %v138 = vpop.permute.xlu0 %137
    %s140 = vtos %v138
    %v141 = vstv %s140
    %v142 = vpack.i.b16 %v141, %v141
    %v144 = vmul.bf16 %v142, %v65
    %v145 = vmul.bf16 %v142, %v66
    %v146 = vmul.bf16 %v142, %v67
    %v147 = vmul.bf16 %v142, %v68
    %v148 = vmul.bf16 %v142, %v69
    %v149 = vmul.bf16 %v142, %v70
    %v150 = vmul.bf16 %v142, %v71
    %v151 = vmul.bf16 %v142, %v72
    %v152 = vadd.bf16 %v121, %v144
    %v153 = vadd.bf16 %v122, %v145
    %v154 = vadd.bf16 %v123, %v146
    %v155 = vadd.bf16 %v124, %v147
    %v156 = vadd.bf16 %v125, %v148
    %v157 = vadd.bf16 %v126, %v149
    %v158 = vadd.bf16 %v127, %v150
    %v159 = vadd.bf16 %v128, %v151
    %160 = vrot.lane.b32.xlu0 %v136, 126
    %v161 = vpop.permute.xlu0 %160
    %s163 = vtos %v161
    %v164 = vstv %s163
    %v165 = vpack.i.b16 %v164, %v164
    %v167 = vmul.bf16 %v165, %v74
    %v168 = vmul.bf16 %v165, %v75
    %v169 = vmul.bf16 %v165, %v76
    %v170 = vmul.bf16 %v165, %v77
    %v171 = vmul.bf16 %v165, %v78
    %v172 = vmul.bf16 %v165, %v79
    %v173 = vmul.bf16 %v165, %v80
    %v174 = vmul.bf16 %v165, %v81
    %v175 = vadd.bf16 %v152, %v167
    %v176 = vadd.bf16 %v153, %v168
    %v177 = vadd.bf16 %v154, %v169
    %v178 = vadd.bf16 %v155, %v170
    %v179 = vadd.bf16 %v156, %v171
    %v180 = vadd.bf16 %v157, %v172
    %v181 = vadd.bf16 %v158, %v173
    %v182 = vadd.bf16 %v159, %v174
    %v183 = vunpack.c.l.bf16 %v175
    %v184 = vunpack.c.l.bf16 %v176
    %v185 = vunpack.c.l.bf16 %v177
    %v186 = vunpack.c.l.bf16 %v178
    %v187 = vunpack.c.l.bf16 %v179
    %v188 = vunpack.c.l.bf16 %v180
    %v189 = vunpack.c.l.bf16 %v181
    %v190 = vunpack.c.l.bf16 %v182
    %v191 = vmax.f32 %v183, %v184
    %v192 = vrot.slane %v191, 4
    %v193 = vmax.f32 %v191, %v192
    %v194 = vrot.slane %v193, 2
    %v195 = vmax.f32 %v193, %v194
    %v196 = vrot.slane %v195, 1
    %v197 = vmax.f32 %v195, %v196
    %v198 = vmax.f32 %v185, %v186
    %v199 = vrot.slane %v198, 4
    %v200 = vmax.f32 %v198, %v199
    %v201 = vrot.slane %v200, 2
    %v202 = vmax.f32 %v200, %v201
    %v203 = vrot.slane %v202, 1
    %v204 = vmax.f32 %v202, %v203
    %v205 = vmax.f32 %v187, %v188
    %v206 = vrot.slane %v205, 4
    %v207 = vmax.f32 %v205, %v206
    %v208 = vrot.slane %v207, 2
    %v209 = vmax.f32 %v207, %v208
    %v210 = vrot.slane %v209, 1
    %v211 = vmax.f32 %v209, %v210
    %v212 = vmax.f32 %v189, %v190
    %v213 = vrot.slane %v212, 4
    %v214 = vmax.f32 %v212, %v213
    %v215 = vrot.slane %v214, 2
    %v216 = vmax.f32 %v214, %v215
    %v217 = vrot.slane %v216, 1
    %v218 = vmax.f32 %v216, %v217
    %vm219 = vcmask 1040384
    %v220 = vsel %vm219, %v197, %v204
    %vm221 = vcmask 1041408
    %v222 = vsel %vm221, %v220, %v211
    %vm223 = vcmask 1042432
    %v224 = vsel %vm223, %v222, %v218
    %v225 = vstv %s82
    %v226 = vadd.f32 %v224, %v225
    %v228 = vshrl.u32 %v136, 16
    %s231 = vtos %v228
    %v232 = vstv %s231
    %v233 = vpack.i.b16 %v232, %v232
    %v235 = vmul.bf16 %v233, %v56
    %v236 = vmul.bf16 %v233, %v57
    %v237 = vmul.bf16 %v233, %v58
    %v238 = vmul.bf16 %v233, %v59
    %v239 = vmul.bf16 %v233, %v60
    %v240 = vmul.bf16 %v233, %v61
    %v241 = vmul.bf16 %v233, %v62
    %v242 = vmul.bf16 %v233, %v63
    %243 = vrot.lane.b32.xlu0 %v228, 127
    %v244 = vpop.permute.xlu0 %243
    %s246 = vtos %v244
    %v247 = vstv %s246
    %v248 = vpack.i.b16 %v247, %v247
    %v250 = vmul.bf16 %v248, %v65
    %v251 = vmul.bf16 %v248, %v66
    %v252 = vmul.bf16 %v248, %v67
    %v253 = vmul.bf16 %v248, %v68
    %v254 = vmul.bf16 %v248, %v69
    %v255 = vmul.bf16 %v248, %v70
    %v256 = vmul.bf16 %v248, %v71
    %v257 = vmul.bf16 %v248, %v72
    %v258 = vadd.bf16 %v235, %v250
    %v259 = vadd.bf16 %v236, %v251
    %v260 = vadd.bf16 %v237, %v252
    %v261 = vadd.bf16 %v238, %v253
    %v262 = vadd.bf16 %v239, %v254
    %v263 = vadd.bf16 %v240, %v255
    %v264 = vadd.bf16 %v241, %v256
    %v265 = vadd.bf16 %v242, %v257
    %266 = vrot.lane.b32.xlu0 %v228, 126
    %v267 = vpop.permute.xlu0 %266
    %s269 = vtos %v267
    %v270 = vstv %s269
    %v271 = vpack.i.b16 %v270, %v270
    %v273 = vmul.bf16 %v271, %v74
    %v274 = vmul.bf16 %v271, %v75
    %v275 = vmul.bf16 %v271, %v76
    %v276 = vmul.bf16 %v271, %v77
    %v277 = vmul.bf16 %v271, %v78
    %v278 = vmul.bf16 %v271, %v79
    %v279 = vmul.bf16 %v271, %v80
    %v280 = vmul.bf16 %v271, %v81
    %v281 = vadd.bf16 %v258, %v273
    %v282 = vadd.bf16 %v259, %v274
    %v283 = vadd.bf16 %v260, %v275
    %v284 = vadd.bf16 %v261, %v276
    %v285 = vadd.bf16 %v262, %v277
    %v286 = vadd.bf16 %v263, %v278
    %v287 = vadd.bf16 %v264, %v279
    %v288 = vadd.bf16 %v265, %v280
    %v289 = vunpack.c.l.bf16 %v281
    %v290 = vunpack.c.l.bf16 %v282
    %v291 = vunpack.c.l.bf16 %v283
    %v292 = vunpack.c.l.bf16 %v284
    %v293 = vunpack.c.l.bf16 %v285
    %v294 = vunpack.c.l.bf16 %v286
    %v295 = vunpack.c.l.bf16 %v287
    %v296 = vunpack.c.l.bf16 %v288
    %v297 = vmax.f32 %v289, %v290
    %v298 = vrot.slane %v297, 4
    %v299 = vmax.f32 %v297, %v298
    %v300 = vrot.slane %v299, 2
    %v301 = vmax.f32 %v299, %v300
    %v302 = vrot.slane %v301, 1
    %v303 = vmax.f32 %v301, %v302
    %v304 = vmax.f32 %v291, %v292
    %v305 = vrot.slane %v304, 4
    %v306 = vmax.f32 %v304, %v305
    %v307 = vrot.slane %v306, 2
    %v308 = vmax.f32 %v306, %v307
    %v309 = vrot.slane %v308, 1
    %v310 = vmax.f32 %v308, %v309
    %v311 = vmax.f32 %v293, %v294
    %v312 = vrot.slane %v311, 4
    %v313 = vmax.f32 %v311, %v312
    %v314 = vrot.slane %v313, 2
    %v315 = vmax.f32 %v313, %v314
    %v316 = vrot.slane %v315, 1
    %v317 = vmax.f32 %v315, %v316
    %v318 = vmax.f32 %v295, %v296
    %v319 = vrot.slane %v318, 4
    %v320 = vmax.f32 %v318, %v319
    %v321 = vrot.slane %v320, 2
    %v322 = vmax.f32 %v320, %v321
    %v323 = vrot.slane %v322, 1
    %v324 = vmax.f32 %v322, %v323
    %v325 = vsel %vm219, %v303, %v310
    %v326 = vsel %vm221, %v325, %v317
    %v327 = vsel %vm223, %v326, %v324
    %v328 = vstv %s83
    %v329 = vadd.f32 %v327, %v328
    %v330 = vld [vmem:[%s1] sm:$0x2]
    %v333 = vunpack.c.l.s4 1983009808
    %v334 = vunpack.c.0.s8 %v333
    %v335 = vlaneseq
    %v336 = vshrl.u32 %v335, 7
    %v337 = vsub.s32 %v334, %v336
    %v338 = vrot.slane %v330, %v337
    %v339 = vrot.slane %v338, 1
    %s341 = vtos %v339
    %v342 = vstv %s341
    %v343 = vpack.i.b16 %v342, %v342
    %v345 = vmul.bf16 %v343, %v56
    %v346 = vmul.bf16 %v343, %v57
    %v347 = vmul.bf16 %v343, %v58
    %v348 = vmul.bf16 %v343, %v59
    %v349 = vmul.bf16 %v343, %v60
    %v350 = vmul.bf16 %v343, %v61
    %v351 = vmul.bf16 %v343, %v62
    %v352 = vmul.bf16 %v343, %v63
    %353 = vrot.lane.b32.xlu0 %v339, 127
    %v354 = vpop.permute.xlu0 %353
    %s356 = vtos %v354
    %v357 = vstv %s356
    %v358 = vpack.i.b16 %v357, %v357
    %v360 = vmul.bf16 %v358, %v65
    %v361 = vmul.bf16 %v358, %v66
    %v362 = vmul.bf16 %v358, %v67
    %v363 = vmul.bf16 %v358, %v68
    %v364 = vmul.bf16 %v358, %v69
    %v365 = vmul.bf16 %v358, %v70
    %v366 = vmul.bf16 %v358, %v71
    %v367 = vmul.bf16 %v358, %v72
    %v368 = vadd.bf16 %v345, %v360
    %v369 = vadd.bf16 %v346, %v361
    %v370 = vadd.bf16 %v347, %v362
    %v371 = vadd.bf16 %v348, %v363
    %v372 = vadd.bf16 %v349, %v364
    %v373 = vadd.bf16 %v350, %v365
    %v374 = vadd.bf16 %v351, %v366
    %v375 = vadd.bf16 %v352, %v367
    %376 = vrot.lane.b32.xlu0 %v339, 126
    %v377 = vpop.permute.xlu0 %376
    %s379 = vtos %v377
    %v380 = vstv %s379
    %v381 = vpack.i.b16 %v380, %v380
    %v383 = vmul.bf16 %v381, %v74
    %v384 = vmul.bf16 %v381, %v75
    %v385 = vmul.bf16 %v381, %v76
    %v386 = vmul.bf16 %v381, %v77
    %v387 = vmul.bf16 %v381, %v78
    %v388 = vmul.bf16 %v381, %v79
    %v389 = vmul.bf16 %v381, %v80
    %v390 = vmul.bf16 %v381, %v81
    %v391 = vadd.bf16 %v368, %v383
    %v392 = vadd.bf16 %v369, %v384
    %v393 = vadd.bf16 %v370, %v385
    %v394 = vadd.bf16 %v371, %v386
    %v395 = vadd.bf16 %v372, %v387
    %v396 = vadd.bf16 %v373, %v388
    %v397 = vadd.bf16 %v374, %v389
    %v398 = vadd.bf16 %v375, %v390
    %v399 = vunpack.c.l.bf16 %v391
    %v400 = vunpack.c.l.bf16 %v392
    %v401 = vunpack.c.l.bf16 %v393
    %v402 = vunpack.c.l.bf16 %v394
    %v403 = vunpack.c.l.bf16 %v395
    %v404 = vunpack.c.l.bf16 %v396
    %v405 = vunpack.c.l.bf16 %v397
    %v406 = vunpack.c.l.bf16 %v398
    %v407 = vmax.f32 %v399, %v400
    %v408 = vrot.slane %v407, 4
    %v409 = vmax.f32 %v407, %v408
    %v410 = vrot.slane %v409, 2
    %v411 = vmax.f32 %v409, %v410
    %v412 = vrot.slane %v411, 1
    %v413 = vmax.f32 %v411, %v412
    %v414 = vmax.f32 %v401, %v402
    %v415 = vrot.slane %v414, 4
    %v416 = vmax.f32 %v414, %v415
    %v417 = vrot.slane %v416, 2
    %v418 = vmax.f32 %v416, %v417
    %v419 = vrot.slane %v418, 1
    %v420 = vmax.f32 %v418, %v419
    %v421 = vmax.f32 %v403, %v404
    %v422 = vrot.slane %v421, 4
    %v423 = vmax.f32 %v421, %v422
    %v424 = vrot.slane %v423, 2
    %v425 = vmax.f32 %v423, %v424
    %v426 = vrot.slane %v425, 1
    %v427 = vmax.f32 %v425, %v426
    %v428 = vmax.f32 %v405, %v406
    %v429 = vrot.slane %v428, 4
    %v430 = vmax.f32 %v428, %v429
    %v431 = vrot.slane %v430, 2
    %v432 = vmax.f32 %v430, %v431
    %v433 = vrot.slane %v432, 1
    %v434 = vmax.f32 %v432, %v433
    %v435 = vsel %vm219, %v413, %v420
    %v436 = vsel %vm221, %v435, %v427
    %v437 = vsel %vm223, %v436, %v434
    %v438 = vstv %s84
    %v439 = vadd.f32 %v437, %v438
    %v440 = vstv %s85
    %v441 = vmul.f32 %v440, %v226
    %v442 = vstv %s112
    %v443 = vadd.f32 %v442, %v441
    %v444 = vstv %s86
    %v445 = vmul.f32 %v444, %v226
    %v447 = vrot.slane %v445, 1
    %v449 = vadd.f32 %v443, %v447
    %v450 = vstv %s87
    %v451 = vmul.f32 %v450, %v226
    %v453 = vrot.slane %v451, 2
    %v455 = vadd.f32 %v449, %v453
    %v456 = vstv %s88
    %v457 = vmul.f32 %v456, %v329
    %v458 = vadd.f32 %v455, %v457
    %v459 = vstv %s89
    %v460 = vmul.f32 %v459, %v329
    %v462 = vrot.slane %v460, 1
    %v464 = vadd.f32 %v458, %v462
    %v465 = vstv %s90
    %v466 = vmul.f32 %v465, %v329
    %v468 = vrot.slane %v466, 2
    %v470 = vadd.f32 %v464, %v468
    %v471 = vstv %s91
    %v472 = vmul.f32 %v471, %v439
    %v473 = vadd.f32 %v470, %v472
    %v474 = vstv %s92
    %v475 = vmul.f32 %v474, %v439
    %v477 = vrot.slane %v475, 1
    %v479 = vadd.f32 %v473, %v477
    %v480 = vstv %s93
    %v481 = vmul.f32 %v480, %v439
    %v483 = vrot.slane %v481, 2
    %v485 = vadd.f32 %v479, %v483
    %v486 = vmax.f32 %v485, 0.0
    %v487 = vpack.c.bf16 %v486, %v486
    %488 = vst [vmem:[%s5] sm:$0x1] %v487
    %v489 = vstv %s94
    %v490 = vmul.f32 %v489, %v226
    %v491 = vstv %s113
    %v492 = vadd.f32 %v491, %v490
    %v493 = vstv %s95
    %v494 = vmul.f32 %v493, %v226
    %v496 = vrot.slane %v494, 1
    %v498 = vadd.f32 %v492, %v496
    %v499 = vstv %s96
    %v500 = vmul.f32 %v499, %v226
    %v502 = vrot.slane %v500, 2
    %v504 = vadd.f32 %v498, %v502
    %v505 = vstv %s97
    %v506 = vmul.f32 %v505, %v329
    %v507 = vadd.f32 %v504, %v506
    %v508 = vstv %s98
    %v509 = vmul.f32 %v508, %v329
    %v511 = vrot.slane %v509, 1
    %v513 = vadd.f32 %v507, %v511
    %v514 = vstv %s99
    %v515 = vmul.f32 %v514, %v329
    %v517 = vrot.slane %v515, 2
    %v519 = vadd.f32 %v513, %v517
    %v520 = vstv %s100
    %v521 = vmul.f32 %v520, %v439
    %v522 = vadd.f32 %v519, %v521
    %v523 = vstv %s101
    %v524 = vmul.f32 %v523, %v439
    %v526 = vrot.slane %v524, 1
    %v528 = vadd.f32 %v522, %v526
    %v529 = vstv %s102
    %v530 = vmul.f32 %v529, %v439
    %v532 = vrot.slane %v530, 2
    %v534 = vadd.f32 %v528, %v532
    %v535 = vmax.f32 %v534, 0.0
    %v536 = vpack.c.bf16 %v535, %v535
    %s537 = scalar_lea.vmem %s5, 1
    %538 = vst [vmem:[%s537] sm:$0x1] %v536
    %v539 = vstv %s103
    %v540 = vmul.f32 %v539, %v226
    %v541 = vstv %s114
    %v542 = vadd.f32 %v541, %v540
    %v543 = vstv %s104
    %v544 = vmul.f32 %v543, %v226
    %v546 = vrot.slane %v544, 1
    %v548 = vadd.f32 %v542, %v546
    %v549 = vstv %s105
    %v550 = vmul.f32 %v549, %v226
    %v552 = vrot.slane %v550, 2
    %v554 = vadd.f32 %v548, %v552
    %v555 = vstv %s106
    %v556 = vmul.f32 %v555, %v329
    %v557 = vadd.f32 %v554, %v556
    %v558 = vstv %s107
    %v559 = vmul.f32 %v558, %v329
    %v561 = vrot.slane %v559, 1
    %v563 = vadd.f32 %v557, %v561
    %v564 = vstv %s108
    %v565 = vmul.f32 %v564, %v329
    %v567 = vrot.slane %v565, 2
    %v569 = vadd.f32 %v563, %v567
    %v570 = vstv %s109
    %v571 = vmul.f32 %v570, %v439
    %v572 = vadd.f32 %v569, %v571
    %v573 = vstv %s110
    %v574 = vmul.f32 %v573, %v439
    %v576 = vrot.slane %v574, 1
    %v578 = vadd.f32 %v572, %v576
    %v579 = vstv %s111
    %v580 = vmul.f32 %v579, %v439
    %v582 = vrot.slane %v580, 2
    %v584 = vadd.f32 %v578, %v582
    %v585 = vmax.f32 %v584, 0.0
    %v586 = vpack.c.bf16 %v585, %v585
    %s587 = scalar_lea.vmem %s5, 2
    %588 = vst [vmem:[%s587] sm:$0x1] %v586
    // Predicated region
    $region34: #{model_forward.1} parent=1 // pred_check
      _
    $region35: #{model_forward.1} parent=1 // pred_check_branch
      %590 = sbr.rel (0) target = $region37
    $region36: #{model_forward.1} parent=1 // pred_region
      _
    $region37: #{model_forward.1} parent=1 // pred_fallthru
      _
    // Predicated region
    $region38: #{model_forward.1} parent=1 // pred_check
      _
    $region39: #{model_forward.1} parent=1 // pred_check_branch
      %592 = sbr.rel (0) target = $region41
    $region40: #{model_forward.1} parent=1 // pred_region
      _
    $region41: #{model_forward.1} parent=1 // pred_fallthru
      _
    %593 = vsyncpa [#allocation3], 1
    %594 = vsyncpa [#allocation5], 1

</llo_original>
